<compile_context>
chip_gen: v7x
topology: tpu7x:2x2x1
jax: 0.10.0
libtpu: 0.0.40
codegen_flags: <defaults>
</compile_context>

<pallas_src>
import jax
import jax.numpy as jnp
from jax.experimental import pallas as pl
from jax.experimental.pallas import tpu as pltpu


_SMALL_BLOCK_BYTES = 1 * 1024 * 1024     # below this: single-block kernel
_TARGET_TILE_BYTES = 2 * 1024 * 1024     # per-input-buffer tile target
_VMEM_LIMIT_BYTES = 32 * 1024 * 1024     # safe on v5e / v6e / v7x


def _softplus(x):
    # numerically stable softplus: max(x, 0) + log1p(exp(-|x|))
    return jnp.maximum(x, 0.0) + jnp.log1p(jnp.exp(-jnp.abs(x)))


def _elementwise(x, gan_type, target_val):
    """Elementwise transform, specialized at trace time (x is f32)."""
    if gan_type == "vanilla":
        # BCEWithLogitsLoss with constant target t:
        #   t * softplus(-x) + (1 - t) * softplus(x)
        t = float(target_val)
        if t == 1.0:
            return _softplus(-x)
        if t == 0.0:
            return _softplus(x)
        return t * _softplus(-x) + (1.0 - t) * _softplus(x)
    if gan_type == "lsgan":
        d = x - float(target_val)
        return d * d
    if gan_type == "wgan_softplus":
        return _softplus(-x) if target_val else _softplus(x)
    # 'standard' and 'wgan': identity; the +/- sign is folded into final_scale.
    return x


def _make_single_block_kernel(gan_type, target_val, final_scale):
    """Whole slab in one block: no grid reduction, no scratch, no phases."""

    def kernel(x_ref, o_ref):
        x = x_ref[...].astype(jnp.float32)
        val = _elementwise(x, gan_type, target_val)
        o_ref[...] = jnp.reshape(jnp.sum(val) * final_scale, (1, 1))

    return kernel


def _make_tiled_kernel(gan_type, target_val, final_scale, tm, K, vec_acc):
    """Grid (outer parallel, inner reduction); (8, K) vreg partial-sum acc."""

    def kernel(x_ref, o_ref, acc_ref):
        j = pl.program_id(1)

        @pl.when(j == 0)
        def _():
            acc_ref[...] = jnp.zeros_like(acc_ref)

        x = x_ref[...].astype(jnp.float32)
        val = _elementwise(x, gan_type, target_val)

        if vec_acc:
            # Pure VPU adds over the leading axis; no per-step cross-lane work.
            acc_ref[...] += jnp.sum(val.reshape(tm // 8, 8, K), axis=0)
        else:
            acc_ref[...] += jnp.reshape(jnp.sum(val), (1, 1))

        @pl.when(j == pl.num_programs(1) - 1)
        def _():
            total = jnp.sum(acc_ref[...]) * final_scale
            o_ref[...] = jnp.reshape(total, (1, 1, 1))

    return kernel


def _choose_lane_width(n, last_dim):
    """Largest of 512/256/128 dividing n; else keep the original trailing dim."""
    for k in (512, 256, 128):
        if n % k == 0:
            return k
    return max(int(last_dim), 1)


def _choose_row_tile(M, K, itemsize, target_tile_bytes):
    """Largest sublane-aligned divisor of M within the VMEM tile budget."""
    sub = max(8, 32 // max(itemsize, 1))          # 8 f32 / 16 bf16 / 32 int8
    target_rows = max(sub, target_tile_bytes // max(K * itemsize, 1))
    if M <= target_rows:
        return M                                   # full-extent block
    start = (min(M, target_rows) // sub) * sub
    for tm in range(start, sub - 1, -sub):
        if M % tm == 0:
            return tm
    for tm in range(min(M, target_rows), 0, -1):   # fallback: any divisor
        if M % tm == 0:
            return tm
    return M


def gan_loss(
    x,
    target_is_real,
    is_disc=False,
    *,
    gan_type="standard",
    real_label_val=1.0,
    fake_label_val=0.0,
    loss_weight=1.0,
    small_block_bytes=_SMALL_BLOCK_BYTES,
    target_tile_bytes=_TARGET_TILE_BYTES,
):
    """Pallas implementation of GANLoss.forward. Returns a scalar jnp.float32."""
    if x.ndim == 0:
        x = x.reshape(1, 1)

    sign = 1.0
    target_val = None
    if gan_type == "standard":
        if is_disc:
            sign = -1.0 if target_is_real else 1.0
        else:
            sign = -1.0
    elif gan_type == "wgan":
        sign = -1.0 if target_is_real else 1.0
    elif gan_type == "wgan_softplus":
        target_val = bool(target_is_real)
    elif gan_type in ("vanilla", "lsgan"):
        target_val = real_label_val if target_is_real else fake_label_val
    else:
        # TODO(synk): 'hinge' in the reference calls nn.ReLU()(input, target),
        # which raises a TypeError in PyTorch as written; not reproduced here.
        raise NotImplementedError(f"GAN type {gan_type} is not implemented.")

    n = int(x.size)
    weight = 1.0 if is_disc else float(loss_weight)
    final_scale = sign * weight / float(n)

    # Lane-dense flatten; keep the native dtype (no f32 copy in HBM).
    K = _choose_lane_width(n, x.shape[-1])
    x2 = x.reshape(-1, K)
    M = n // K
    itemsize = x2.dtype.itemsize
    total_bytes = n * itemsize

    compiler_params = pltpu.CompilerParams(
        dimension_semantics=("parallel", "arbitrary"),
        vmem_limit_bytes=_VMEM_LIMIT_BYTES,
    )

    if total_bytes <= small_block_bytes:
        # Loss-sized tensors: one block, one grid step, no accumulator.
        kernel = _make_single_block_kernel(gan_type, target_val, final_scale)
        out = pl.pallas_call(
            kernel,
            out_shape=jax.ShapeDtypeStruct((1, 1), jnp.float32),
            grid_spec=pltpu.PrefetchScalarGridSpec(
                num_scalar_prefetch=0,
                grid=(1,),
                in_specs=[pl.BlockSpec((M, K), lambda i: (0, 0))],
                out_specs=pl.BlockSpec((1, 1), lambda i: (0, 0)),
            ),
            compiler_params=pltpu.CompilerParams(
                dimension_semantics=("arbitrary",),
                vmem_limit_bytes=_VMEM_LIMIT_BYTES,
            ),
        )(x2)
        return out[0, 0]

    # Tiled, pipelined path.
    tm = _choose_row_tile(M, K, itemsize, target_tile_bytes)
    vec_acc = (tm % 8 == 0)
    n_blocks = M // tm
    n_outer = 2 if (n_blocks >= 2 and n_blocks % 2 == 0) else 1
    n_inner = n_blocks // n_outer

    acc_shape = (8, K) if vec_acc else (1, 1)
    kernel = _make_tiled_kernel(gan_type, target_val, final_scale, tm, K, vec_acc)

    out = pl.pallas_call(
        kernel,
        out_shape=jax.ShapeDtypeStruct((n_outer, 1, 1), jnp.float32),
        grid_spec=pltpu.PrefetchScalarGridSpec(
            num_scalar_prefetch=0,
            grid=(n_outer, n_inner),
            in_specs=[pl.BlockSpec((tm, K), lambda i, j: (i * n_inner + j, 0))],
            out_specs=pl.BlockSpec((1, 1, 1), lambda i, j: (i, 0, 0)),
            scratch_shapes=[pltpu.VMEM(acc_shape, jnp.float32)],
        ),
        compiler_params=compiler_params,
    )(x2)
    # Per-outer-block partials already carry final_scale; sum is linear.
    return jnp.sum(out)


def _ref_loss(x, target_is_real, is_disc, gan_type, rl=1.0, fl=0.0, lw=1.0):
    """Pure-JAX reference mirroring the PyTorch module semantics."""
    xf = x.astype(jnp.float32)
    if gan_type == "standard":
        if is_disc:
            loss = -jnp.mean(xf) if target_is_real else jnp.mean(xf)
        else:
            loss = -jnp.mean(xf)
    elif gan_type == "wgan":
        loss = -jnp.mean(xf) if target_is_real else jnp.mean(xf)
    elif gan_type == "wgan_softplus":
        loss = (
            jnp.mean(jax.nn.softplus(-xf))
            if target_is_real
            else jnp.mean(jax.nn.softplus(xf))
        )
    elif gan_type == "vanilla":
        t = rl if target_is_real else fl
        loss = jnp.mean(t * jax.nn.softplus(-xf) + (1.0 - t) * jax.nn.softplus(xf))
    elif gan_type == "lsgan":
        t = rl if target_is_real else fl
        loss = jnp.mean((xf - t) ** 2)
    else:
        raise NotImplementedError(gan_type)
    return loss if is_disc else loss * lw


if __name__ == "__main__":
    key = jax.random.PRNGKey(0)
    k1, k2, k3 = jax.random.split(key, 3)

    real_label_val, fake_label_val, loss_weight = 1.0, 0.0, 2.0

    # Small NCHW discriminator prediction (single-block fast path).
    x_small = jax.random.normal(k1, (2, 4, 16, 16), dtype=jnp.float32)
    # bf16 input forced through the tiled / pipelined path (multi-step grid,
    # 2 parallel partial sums) to validate that kernel variant as well.
    x_bf16 = jax.random.normal(k2, (4, 8, 64, 128), dtype=jnp.float32).astype(
        jnp.bfloat16
    )
    # Awkward shape exercising the non-128-multiple lane-width fallback.
    x_odd = jax.random.normal(k3, (2, 3, 5, 7), dtype=jnp.float32)

    gan_types = ("standard", "vanilla", "lsgan", "wgan", "wgan_softplus")

    def check(x, gan_type, target_is_real, is_disc, **kw):
        got = gan_loss(
            x,
            target_is_real,
            is_disc,
            gan_type=gan_type,
            real_label_val=real_label_val,
            fake_label_val=fake_label_val,
            loss_weight=loss_weight,
            **kw,
        )
        want = _ref_loss(
            x, target_is_real, is_disc, gan_type,
            rl=real_label_val, fl=fake_label_val, lw=loss_weight,
        )
        got = float(jax.block_until_ready(got))
        want = float(want)
        assert abs(got - want) <= 1e-4 + 1e-3 * abs(want), (
            gan_type, target_is_real, is_disc, x.shape, str(x.dtype), got, want
        )
        return got

    results = []
    # Full case sweep on the loss-sized input (single-block path).
    for gan_type in gan_types:
        for target_is_real in (True, False):
            for is_disc in (True, False):
                results.append(check(x_small, gan_type, target_is_real, is_disc))

    # Tiled path (bf16 streamed from HBM, multi-step grid, 2 partials) and the
    # lane-width fallback.
    for gan_type in gan_types:
        results.append(
            check(
                x_bf16, gan_type, True, False,
                small_block_bytes=0, target_tile_bytes=64 * 1024,
            )
        )
        results.append(check(x_odd, gan_type, False, True))

    print("KERNEL_OK")
</pallas_src>

<mosaic_0001>
module attributes {stable_mosaic.version = 11 : i64} {
  func.func @kernel(%arg0: i32, %arg1: memref<4x512xf32, #tpu.memory_space<vmem>>, %arg2: memref<1x1xf32, #tpu.memory_space<vmem>>) attributes {dimension_semantics = [#tpu.dimension_semantics<arbitrary>], iteration_bounds = array<i64: 1>, scalar_prefetch = 0 : i64, scratch_operands = 0 : i64, tpu.core_type = #tpu.core_type<tc>, window_params = [{pipeline_mode = #tpu.pipeline_mode<synchronous>, transform_indices = @transform_0, window_bounds = array<i64: 4, 512>}, {pipeline_mode = #tpu.pipeline_mode<synchronous>, transform_indices = @transform_1, window_bounds = array<i64: 1, 1>}]} {
    %c0 = arith.constant 0 : index
    %c0_0 = arith.constant 0 : index
    %0 = vector.load %arg1[%c0, %c0_0] : memref<4x512xf32, #tpu.memory_space<vmem>>, vector<4x512xf32>
    %1 = vector.shape_cast %0 : vector<4x512xf32> to vector<1x4x512xf32>
    %cst = arith.constant dense<0.000000e+00> : vector<1xf32>
    %2 = vector.multi_reduction <add>, %1, %cst [1, 2] : vector<1x4x512xf32> to vector<1xf32>
    %3 = vector.shape_cast %2 : vector<1xf32> to vector<1x1x1xf32>
    %4 = vector.extract %3[0, 0, 0] : f32 from vector<1x1x1xf32>
    %cst_1 = arith.constant -4.8828125E-4 : f32
    %5 = arith.mulf %4, %cst_1 : f32
    %6 = vector.broadcast %5 : f32 to vector<1x1xf32>
    %c0_2 = arith.constant 0 : index
    %c0_3 = arith.constant 0 : index
    %7 = vector.load %arg2[%c0_2, %c0_3] : memref<1x1xf32, #tpu.memory_space<vmem>>, vector<1x1xf32>
    tpu.vector_store %arg2[%c0_2, %c0_3], %6 {strides = array<i32>} : memref<1x1xf32, #tpu.memory_space<vmem>>, vector<1x1xf32>,
    return
  }
  func.func @transform_0(%arg0: i32) -> (i32, i32) {
    %c0_i32 = arith.constant 0 : i32
    %c0_i32_0 = arith.constant 0 : i32
    %c0_i32_1 = arith.constant 0 : i32
    return %c0_i32, %c0_i32_0 : i32, i32
  }
  func.func @transform_1(%arg0: i32) -> (i32, i32) {
    %c0_i32 = arith.constant 0 : i32
    %c0_i32_0 = arith.constant 0 : i32
    %c0_i32_1 = arith.constant 0 : i32
    return %c0_i32, %c0_i32_0 : i32, i32
  }
}

</mosaic_0001>

<llo_original>
// kernel: tpu_custom_call.1
$region0: #{tpu_custom_call.1}
  #allocation0 [shape = 'u32[]', space=smem, size = 0x4, offset = 0x4, fixed_abs, tag = 'smem constant byte address 0x4 - core index']
  #allocation1 [shape = 'u32[144,128]{1,0:T(1,128)}', space=vmem, size = 0x12000, scoped, tag = 'internal scratch']
  %s0 = inlined_call_operand.hbm [shape: f32[4,512], index: 0, kind: input, shape index: {}]
  %s1 = inlined_call_operand.hbm [shape: f32[1,1], index: 1, kind: output, shape index: {}]
  %s2 = sld [smem:[#allocation0]]
  $region18: #{tpu_custom_call.1} parent=0
    _
  %s4 = ssub.s32 1, %s2
  %s5 = scalar_select 0, %s4, %s2
  $region1: #{tpu_custom_call.1} parent=0
    #allocation2 [shape = 'u8[8192]{0}', space=vmem, size = 0x2000, scoped, tag = 'input window, operand 0, single buffered']
    #allocation3 [shape = 's32[1]{0}', space=sflag, size = 0x4, scoped, tag = 'scoped memory for tpu_custom_call.1']
    #allocation4 [shape = 's32[1]{0}', space=sflag, size = 0x4, scoped, tag = 'scoped memory for tpu_custom_call.1']
    #allocation5 [shape = 'u8[512]{0}', space=vmem, size = 0x400, scoped, tag = 'output window, operand 0, single buffered']
    %6 = vsyncpa [#allocation3], 0
    %7 = vsyncpa [#allocation4], 0
    // Predicated region
    $region2: #{tpu_custom_call.1} parent=1 // pred_check
      _
    $region3: #{tpu_custom_call.1} parent=1 // pred_check_branch
      %9 = sbr.rel (0) target = $region5
    $region4: #{tpu_custom_call.1} parent=1 // pred_region
      %s11 = ssub.s32 256, 256
      %12 = vsyncadd [#allocation3], %s11
      %s14 = sshll.u32 [#allocation2], 4
      %s15 = int_to_ptr.vmem [resolvable:$true] %s14
      %17 = dma.hbm_to_vmem [thread:$0]  %s0, 256, %s15, [#allocation3]
    $region5: #{tpu_custom_call.1} parent=1 // pred_fallthru
      _
    // Predicated region
    $region6: #{tpu_custom_call.1} parent=1 // pred_check
      _
    $region7: #{tpu_custom_call.1} parent=1 // pred_check_branch
      %19 = sbr.rel (0) target = $region9
    $region8: #{tpu_custom_call.1} parent=1 // pred_region
      %20 = dma.done [#allocation3], 256
    $region9: #{tpu_custom_call.1} parent=1 // pred_fallthru
      _
    %v21 = vld [vmem:[#allocation2] sm:$0xff]
    %v22 = vld [vmem:[#allocation2 + $0x8] sm:$0xff]
    %v25 = vcombine.high %v21, %v21
    %v26 = vcombine.high %v22, %v22
    %vm29 = vcmask 1043456
    %v30 = vsel %vm29, %v21, 0.0
    %v31 = vsel %vm29, %v25, 0.0
    %v32 = vadd.f32 %v30, %v31
    %v33 = vsel %vm29, %v22, 0.0
    %v34 = vadd.f32 %v32, %v33
    %v35 = vsel %vm29, %v26, 0.0
    %v36 = vadd.f32 %v34, %v35
    %37 = vadd.xlane.f32.xlu0 %v36
    %v38 = vpop.xlane.xlu0 %37
    %v39 = vrot.slane %v38, 4
    %v40 = vadd.f32 %v38, %v39
    %v41 = vrot.slane %v40, 2
    %v42 = vadd.f32 %v40, %v41
    %v43 = vrot.slane %v42, 1
    %v44 = vadd.f32 %v42, %v43
    %s45 = vtos %v44
    %s46 = smul.f32 %s45, -0.00048828125
    %v47 = vstv %s46
    %vm48 = vcmask 0
    %49 = vst.msk [vmem:[#allocation5] sm:$0x1] %vm48, %v47
    // Predicated region
    $region10: #{tpu_custom_call.1} parent=1 // pred_check
      _
    $region11: #{tpu_custom_call.1} parent=1 // pred_check_branch
      %51 = sbr.rel (0) target = $region13
    $region12: #{tpu_custom_call.1} parent=1 // pred_region
      %s53 = ssub.s32 16, 16
      %54 = vsyncadd [#allocation4], %s53
      %s56 = sshll.u32 [#allocation5], 4
      %s57 = int_to_ptr.vmem [resolvable:$true] %s56
      %59 = dma.vmem_to_hbm [thread:$0]  %s57, 16, %s1, [#allocation4]
    $region13: #{tpu_custom_call.1} parent=1 // pred_fallthru
      _
    // Predicated region
    $region14: #{tpu_custom_call.1} parent=1 // pred_check
      _
    $region15: #{tpu_custom_call.1} parent=1 // pred_check_branch
      %61 = sbr.rel (0) target = $region17
    $region16: #{tpu_custom_call.1} parent=1 // pred_region
      %62 = dma.done [#allocation4], 16
    $region17: #{tpu_custom_call.1} parent=1 // pred_fallthru
      _
    %63 = vsyncpa [#allocation3], 1
    %64 = vsyncpa [#allocation4], 1

</llo_original>
